<compile_context>
chip_gen: v6e
topology: v6e:2x2x1
jax: 0.10.0
libtpu: 0.0.40
codegen_flags: <defaults>
</compile_context>

<pallas_src>
import math

import jax
import jax.numpy as jnp
from jax.experimental import pallas as pl
from jax.experimental.pallas import tpu as pltpu


# ----------------------------- Pallas kernel -------------------------------

def _round_up(x, m):
    return ((x + m - 1) // m) * m


def _matmul_kernel(x_ref, w_ref, o_ref, acc_ref):
    # grid = (M//tm, N//tn, K//tk); last axis is the reduction axis.
    @pl.when(pl.program_id(2) == 0)
    def _():
        acc_ref[...] = jnp.zeros_like(acc_ref)

    acc_ref[...] += jnp.dot(
        x_ref[...], w_ref[...], preferred_element_type=jnp.float32
    )

    @pl.when(pl.program_id(2) == pl.num_programs(2) - 1)
    def _():
        o_ref[...] = acc_ref[...].astype(o_ref.dtype)


def linear_nobias(x2d, w_t, *, tm=256, tn=256, tk=512,
                  compute_dtype=jnp.bfloat16, out_dtype=jnp.float32):
    """Compute x2d @ w_t with a tiled Pallas MXU matmul.

    x2d: (M, K), w_t: (K, N)  ->  (M, N) in out_dtype (f32 accumulation).

    Inputs are cast to `compute_dtype` (bf16 by default) and zero-padded so
    that every tile is (8, 128)-aligned and the output stores are lane-dense.
    Padding is sliced off before returning.
    """
    M, K = x2d.shape
    K2, N = w_t.shape
    assert K == K2

    x2d = x2d.astype(compute_dtype)
    w_t = w_t.astype(compute_dtype)

    # Clamp tiles to the (padded) problem size; keep MXU/lane alignment.
    tm = max(8, min(tm, _round_up(M, 8)))
    tn = max(128, min(tn, _round_up(N, 128)))
    tk = max(128, min(tk, _round_up(K, 128)))

    Mp = _round_up(M, tm)
    Kp = _round_up(K, tk)
    Np = _round_up(N, tn)
    if (Mp, Kp) != (M, K):
        x2d = jnp.pad(x2d, ((0, Mp - M), (0, Kp - K)))
    if (Kp, Np) != (K, N):
        w_t = jnp.pad(w_t, ((0, Kp - K), (0, Np - N)))

    grid = (Mp // tm, Np // tn, Kp // tk)

    out = pl.pallas_call(
        _matmul_kernel,
        out_shape=jax.ShapeDtypeStruct((Mp, Np), out_dtype),
        grid_spec=pltpu.PrefetchScalarGridSpec(
            num_scalar_prefetch=0,
            grid=grid,
            in_specs=[
                pl.BlockSpec((tm, tk), lambda i, j, k: (i, k)),
                pl.BlockSpec((tk, tn), lambda i, j, k: (k, j)),
            ],
            out_specs=pl.BlockSpec((tm, tn), lambda i, j, k: (i, j)),
            scratch_shapes=[pltpu.VMEM((tm, tn), jnp.float32)],
        ),
        compiler_params=pltpu.CompilerParams(
            dimension_semantics=("parallel", "parallel", "arbitrary"),
            vmem_limit_bytes=32 * 1024 * 1024,
        ),
    )(x2d, w_t)

    if (Mp, Np) != (M, N):
        out = out[:M, :N]
    return out


# ----------------------------- Module wrapper -------------------------------

class AttentionPallas:
    """JAX/Pallas port of mlreco Attention.__init__ / forward (as given)."""

    def __init__(self, dim, heads=8, dim_head=64, *, key=None):
        inner_dim = dim_head * heads
        self.dim = dim
        self.heads = heads
        self.inner_dim = inner_dim
        self.project_out = not (heads == 1 and dim_head == dim)

        if key is None:
            key = jax.random.PRNGKey(0)
        k_qkv, k_out = jax.random.split(key)

        # nn.Linear default init: U(-1/sqrt(fan_in), 1/sqrt(fan_in))
        bound_qkv = 1.0 / math.sqrt(dim)
        # PyTorch weight layout: (out_features, in_features) = (inner_dim, dim)
        self.w_qkv = jax.random.uniform(
            k_qkv, (inner_dim, dim), jnp.float32, -bound_qkv, bound_qkv
        )
        # Cache the transposed weight once (dim, inner_dim): avoids a
        # weight-sized HBM transpose every forward call.
        self.w_qkv_t = jnp.asarray(self.w_qkv.T)

        if self.project_out:
            # Unused by the truncated reference forward; kept for state parity.
            bound_out = 1.0 / math.sqrt(inner_dim)
            self.w_out = jax.random.uniform(
                k_out, (dim, inner_dim), jnp.float32, -bound_out, bound_out
            )
            self.b_out = jnp.zeros((dim,), jnp.float32)
        else:
            self.w_out = None
            self.b_out = None

    def __call__(self, x):
        # x: (B, N, dim)
        B, N, D = x.shape
        assert D == self.dim

        x2d = x.reshape(B * N, D)
        # to_qkv(x) : (B*N, inner_dim) via tiled Pallas matmul (x @ W^T)
        y2d = linear_nobias(x2d, self.w_qkv_t)
        y = y2d.reshape(B, N, self.inner_dim)

        # torch.chunk(3, dim=-1): chunk size = ceil(inner_dim / 3),
        # last chunk holds the remainder (kept in plain JAX: chunk boundaries
        # are generally not lane-aligned and this is pure slicing glue).
        chunk = -(-self.inner_dim // 3)
        qkv = tuple(
            y[..., i * chunk: min((i + 1) * chunk, self.inner_dim)]
            for i in range(3)
            if i * chunk < self.inner_dim
        )
        return qkv


# --------------------------------- main -------------------------------------

if __name__ == "__main__":
    # small shapes: batch=2, seq=8, dim=32, heads=4, dim_head=8 -> inner_dim=32
    B, N, dim, heads, dim_head = 2, 8, 32, 4, 8

    key = jax.random.PRNGKey(0)
    k_x, k_params = jax.random.split(key)
    x = jax.random.normal(k_x, (B, N, dim), jnp.float32)

    attn = AttentionPallas(dim, heads=heads, dim_head=dim_head, key=k_params)

    qkv = attn(x)
    qkv = jax.block_until_ready(qkv)

    # reference check in plain JAX (same bf16 inputs / f32 accumulation)
    x_bf = x.astype(jnp.bfloat16)
    w_bf = attn.w_qkv_t.astype(jnp.bfloat16)
    y_ref = jnp.einsum(
        "bnd,do->bno", x_bf, w_bf, preferred_element_type=jnp.float32
    )
    chunk = -(-attn.inner_dim // 3)
    qkv_ref = tuple(
        y_ref[..., i * chunk: min((i + 1) * chunk, attn.inner_dim)]
        for i in range(3)
        if i * chunk < attn.inner_dim
    )
    assert len(qkv) == len(qkv_ref)
    for a, b in zip(qkv, qkv_ref):
        assert a.shape == b.shape, (a.shape, b.shape)
        assert jnp.allclose(a, b, atol=1e-3, rtol=1e-3)

    print("KERNEL_OK")
</pallas_src>

<mosaic_0001>
module attributes {stable_mosaic.version = 11 : i64} {
  func.func @_matmul_kernel(%arg0: i32, %arg1: i32, %arg2: i32, %arg3: memref<16x128xbf16, #tpu.memory_space<vmem>>, %arg4: memref<128x128xbf16, #tpu.memory_space<vmem>>, %arg5: memref<16x128xf32, #tpu.memory_space<vmem>>, %arg6: memref<16x128xf32, #tpu.memory_space<vmem>>) attributes {dimension_semantics = [#tpu.dimension_semantics<parallel>, #tpu.dimension_semantics<parallel>, #tpu.dimension_semantics<arbitrary>], iteration_bounds = array<i64: 1, 1, 1>, scalar_prefetch = 0 : i64, scratch_operands = 1 : i64, tpu.core_type = #tpu.core_type<tc>, window_params = [{transform_indices = @transform_0, window_bounds = array<i64: 16, 128>}, {transform_indices = @transform_1, window_bounds = array<i64: 128, 128>}, {transform_indices = @transform_2, window_bounds = array<i64: 16, 128>}]} {
    %c0_i32 = arith.constant 0 : i32
    %0 = arith.cmpi eq, %arg2, %c0_i32 : i32
    %1 = arith.extui %0 : i1 to i32
    %c0_i32_0 = arith.constant 0 : i32
    %2 = arith.cmpi ne, %1, %c0_i32_0 : i32
    scf.if %2 {
      %cst_10 = arith.constant 0.000000e+00 : f32
      %12 = vector.broadcast %cst_10 : f32 to vector<16x128xf32>
      %c0_11 = arith.constant 0 : index
      %c0_12 = arith.constant 0 : index
      %13 = vector.load %arg6[%c0_11, %c0_12] : memref<16x128xf32, #tpu.memory_space<vmem>>, vector<16x128xf32>
      tpu.vector_store %arg6[%c0_11, %c0_12], %12 {strides = array<i32>} : memref<16x128xf32, #tpu.memory_space<vmem>>, vector<16x128xf32>,
    } else {
    }
    %c0 = arith.constant 0 : index
    %c0_1 = arith.constant 0 : index
    %3 = vector.load %arg6[%c0, %c0_1] : memref<16x128xf32, #tpu.memory_space<vmem>>, vector<16x128xf32>
    %c0_2 = arith.constant 0 : index
    %c0_3 = arith.constant 0 : index
    %4 = vector.load %arg3[%c0_2, %c0_3] : memref<16x128xbf16, #tpu.memory_space<vmem>>, vector<16x128xbf16>
    %c0_4 = arith.constant 0 : index
    %c0_5 = arith.constant 0 : index
    %5 = vector.load %arg4[%c0_4, %c0_5] : memref<128x128xbf16, #tpu.memory_space<vmem>>, vector<128x128xbf16>
    %cst = arith.constant dense<0.000000e+00> : vector<16x128xf32>
    %6 = tpu.matmul %4, %5, %cst {dimension_numbers = #tpu.dot_dimension_numbers<[1], [0], [0], [1], [0, 0, 1, 1], [], []>} : vector<16x128xbf16>, vector<128x128xbf16>, vector<16x128xf32> -> vector<16x128xf32>
    %7 = arith.addf %3, %6 : vector<16x128xf32>
    %c0_6 = arith.constant 0 : index
    %c0_7 = arith.constant 0 : index
    %8 = vector.load %arg6[%c0_6, %c0_7] : memref<16x128xf32, #tpu.memory_space<vmem>>, vector<16x128xf32>
    tpu.vector_store %arg6[%c0_6, %c0_7], %7 {strides = array<i32>} : memref<16x128xf32, #tpu.memory_space<vmem>>, vector<16x128xf32>,
    %c0_i32_8 = arith.constant 0 : i32
    %9 = arith.cmpi eq, %arg2, %c0_i32_8 : i32
    %10 = arith.extui %9 : i1 to i32
    %c0_i32_9 = arith.constant 0 : i32
    %11 = arith.cmpi ne, %10, %c0_i32_9 : i32
    scf.if %11 {
      %c0_10 = arith.constant 0 : index
      %c0_11 = arith.constant 0 : index
      %12 = vector.load %arg6[%c0_10, %c0_11] : memref<16x128xf32, #tpu.memory_space<vmem>>, vector<16x128xf32>
      %c0_12 = arith.constant 0 : index
      %c0_13 = arith.constant 0 : index
      %13 = vector.load %arg5[%c0_12, %c0_13] : memref<16x128xf32, #tpu.memory_space<vmem>>, vector<16x128xf32>
      tpu.vector_store %arg5[%c0_12, %c0_13], %12 {strides = array<i32>} : memref<16x128xf32, #tpu.memory_space<vmem>>, vector<16x128xf32>,
    } else {
    }
    return
  }
  func.func @transform_0(%arg0: i32, %arg1: i32, %arg2: i32) -> (i32, i32) {
    %c0_i32 = arith.constant 0 : i32
    return %arg0, %arg2 : i32, i32
  }
  func.func @transform_1(%arg0: i32, %arg1: i32, %arg2: i32) -> (i32, i32) {
    %c0_i32 = arith.constant 0 : i32
    return %arg2, %arg1 : i32, i32
  }
  func.func @transform_2(%arg0: i32, %arg1: i32, %arg2: i32) -> (i32, i32) {
    %c0_i32 = arith.constant 0 : i32
    return %arg0, %arg1 : i32, i32
  }
}

</mosaic_0001>

<llo_original>
// kernel: tpu_custom_call.1
$region0: #{tpu_custom_call.1}
  #allocation0 [shape = 'u32[]', space=smem, size = 0x4, offset = 0x4, fixed_abs, tag = 'smem constant byte address 0x4 - core index']
  #allocation1 [shape = 'u32[144,128]{1,0:T(1,128)}', space=vmem, size = 0x12000, scoped, tag = 'internal scratch']
  #allocation2 [shape = 'f32[16,128]{1,0:T(8,128)}', space=vmem, size = 0x2000, scoped, tag = 'scratch operand']
  %s0 = inlined_call_operand.hbm [shape: bf16[16,128], index: 0, kind: input, shape index: {}]
  %s1 = inlined_call_operand.hbm [shape: bf16[128,128], index: 1, kind: input, shape index: {}]
  %s2 = inlined_call_operand.hbm [shape: f32[16,128], index: 2, kind: output, shape index: {}]
  %s3 = sld [smem:[#allocation0]]
  $region34: #{tpu_custom_call.1} parent=0
    _
  %s5 = ssub.s32 1, %s3
  %s6 = scalar_select 0, %s5, %s3
  $region1: #{tpu_custom_call.1} parent=0
    #allocation3 [shape = 'u8[4096]{0}', space=vmem, size = 0x1000, scoped, tag = 'input window, operand 0, single buffered']
    #allocation4 [shape = 's32[1]{0}', space=sflag, size = 0x4, scoped, tag = 'scoped memory for tpu_custom_call.1']
    #allocation5 [shape = 's32[1]{0}', space=sflag, size = 0x4, scoped, tag = 'scoped memory for tpu_custom_call.1']
    #allocation6 [shape = 'u8[32768]{0}', space=vmem, size = 0x8000, scoped, tag = 'input window, operand 1, single buffered']
    #allocation7 [shape = 's32[1]{0}', space=sflag, size = 0x4, scoped, tag = 'scoped memory for tpu_custom_call.1']
    #allocation8 [shape = 'u8[8192]{0}', space=vmem, size = 0x2000, scoped, tag = 'output window, operand 0, single buffered']
    %7 = vsyncpa [#allocation4], 0
    %8 = vsyncpa [#allocation7], 0
    %9 = vsyncpa [#allocation5], 0
    // Predicated region
    $region2: #{tpu_custom_call.1} parent=1 // pred_check
      _
    $region3: #{tpu_custom_call.1} parent=1 // pred_check_branch
      %11 = sbr.rel (0) target = $region5
    $region4: #{tpu_custom_call.1} parent=1 // pred_region
      %s13 = ssub.s32 128, 128
      %14 = vsyncadd [#allocation4], %s13
      %s15 = sshll.u32 [#allocation3], 4
      %s16 = int_to_ptr.vmem [resolvable:$true] %s15
      %21 = dma.hbm_to_vmem [thread:$0]  %s0, 128, %s16, [#allocation4], 64, 64, 4
    $region5: #{tpu_custom_call.1} parent=1 // pred_fallthru
      _
    // Predicated region
    $region6: #{tpu_custom_call.1} parent=1 // pred_check
      _
    $region7: #{tpu_custom_call.1} parent=1 // pred_check_branch
      %23 = sbr.rel (0) target = $region9
    $region8: #{tpu_custom_call.1} parent=1 // pred_region
      %s25 = ssub.s32 1024, 1024
      %26 = vsyncadd [#allocation7], %s25
      %s27 = sshll.u32 [#allocation6], 4
      %s28 = int_to_ptr.vmem [resolvable:$true] %s27
      %33 = dma.hbm_to_vmem [thread:$0]  %s1, 1024, %s28, [#allocation7], 64, 64, 4
    $region9: #{tpu_custom_call.1} parent=1 // pred_fallthru
      _
    // Predicated region
    $region10: #{tpu_custom_call.1} parent=1 // pred_check
      _
    $region11: #{tpu_custom_call.1} parent=1 // pred_check_branch
      %35 = sbr.rel (0) target = $region13
    $region12: #{tpu_custom_call.1} parent=1 // pred_region
      %36 = dma.done [#allocation4], 128
    $region13: #{tpu_custom_call.1} parent=1 // pred_fallthru
      _
    // Predicated region
    $region14: #{tpu_custom_call.1} parent=1 // pred_check
      _
    $region15: #{tpu_custom_call.1} parent=1 // pred_check_branch
      %38 = sbr.rel (0) target = $region17
    $region16: #{tpu_custom_call.1} parent=1 // pred_region
      %39 = dma.done [#allocation7], 1024
    $region17: #{tpu_custom_call.1} parent=1 // pred_fallthru
      _
    %p41 = scmp.eq.s32.totalorder 0, 0
    // Predicated region
    $region18: #{tpu_custom_call.1} parent=1 // pred_check
      %p42 = pneg %p41
    $region19: #{tpu_custom_call.1} parent=1 // pred_check_branch
      %44 = sbr.rel (%p42) target = $region21
    $region20: #{tpu_custom_call.1} parent=1 // pred_region
      %45 = vst [vmem:[#allocation2] sm:$0xff] 0.0
      %46 = vst [vmem:[#allocation2 + $0x8] sm:$0xff] 0.0
    $region21: #{tpu_custom_call.1} parent=1 // pred_fallthru
      _
    %v47 = vld [vmem:[#allocation2] sm:$0xff]
    %v48 = vld [vmem:[#allocation2 + $0x8] sm:$0xff]
    %v49 = vld [vmem:[#allocation3] sm:$0xf]
    %v50 = vld [vmem:[#allocation3 + $0x4] sm:$0xf]
    %v51 = vld [vmem:[#allocation6] sm:$0xf]
    %v52 = vld [vmem:[#allocation6 + $0x4] sm:$0xf]
    %v53 = vld [vmem:[#allocation6 + $0x8] sm:$0xf]
    %v54 = vld [vmem:[#allocation6 + $0xc] sm:$0xf]
    %v55 = vld [vmem:[#allocation6 + $0x10] sm:$0xf]
    %v56 = vld [vmem:[#allocation6 + $0x14] sm:$0xf]
    %v57 = vld [vmem:[#allocation6 + $0x18] sm:$0xf]
    %v58 = vld [vmem:[#allocation6 + $0x1c] sm:$0xf]
    %v59 = vld [vmem:[#allocation6 + $0x20] sm:$0xf]
    %v60 = vld [vmem:[#allocation6 + $0x24] sm:$0xf]
    %v61 = vld [vmem:[#allocation6 + $0x28] sm:$0xf]
    %v62 = vld [vmem:[#allocation6 + $0x2c] sm:$0xf]
    %v63 = vld [vmem:[#allocation6 + $0x30] sm:$0xf]
    %v64 = vld [vmem:[#allocation6 + $0x34] sm:$0xf]
    %v65 = vld [vmem:[#allocation6 + $0x38] sm:$0xf]
    %v66 = vld [vmem:[#allocation6 + $0x3c] sm:$0xf]
    %v69 = vunpack.c.l.b16 %v49
    %v70 = vunpack.c.l.b16 %v50
    %v71 = vpack.c.b16 %v70, %v69
    %v89 = vunpack.c.l.b16 %v51
    %v90 = vunpack.c.l.b16 %v52
    %v91 = vunpack.c.l.b16 %v53
    %v92 = vunpack.c.l.b16 %v54
    %v93 = vunpack.c.l.b16 %v55
    %v94 = vunpack.c.l.b16 %v56
    %v95 = vunpack.c.l.b16 %v57
    %v96 = vunpack.c.l.b16 %v58
    %v97 = vunpack.c.l.b16 %v59
    %v98 = vunpack.c.l.b16 %v60
    %v99 = vunpack.c.l.b16 %v61
    %v100 = vunpack.c.l.b16 %v62
    %v101 = vunpack.c.l.b16 %v63
    %v102 = vunpack.c.l.b16 %v64
    %v103 = vunpack.c.l.b16 %v65
    %v104 = vunpack.c.l.b16 %v66
    %v105 = vpack.c.b16 %v90, %v89
    %v106 = vpack.c.b16 %v92, %v91
    %v107 = vpack.c.b16 %v94, %v93
    %v108 = vpack.c.b16 %v96, %v95
    %v109 = vpack.c.b16 %v98, %v97
    %v110 = vpack.c.b16 %v100, %v99
    %v111 = vpack.c.b16 %v102, %v101
    %v112 = vpack.c.b16 %v104, %v103
    %121 = vmatprep.subr.bf16.mxu0 0
    %122 = vmatpush1.bf16.msra.mxu0 %v112
    %123 = vmatprep.subr.bf16.mxu0 0
    %124 = vmatpush1.bf16.msra.mxu0 %v111
    %125 = vmatprep.subr.bf16.mxu0 0
    %126 = vmatpush1.bf16.msra.mxu0 %v110
    %127 = vmatprep.subr.bf16.mxu0 0
    %128 = vmatpush1.bf16.msra.mxu0 %v109
    %129 = vmatprep.subr.bf16.mxu0 0
    %130 = vmatpush1.bf16.msra.mxu0 %v108
    %131 = vmatprep.subr.bf16.mxu0 0
    %132 = vmatpush1.bf16.msra.mxu0 %v107
    %133 = vmatprep.subr.bf16.mxu0 0
    %134 = vmatpush1.bf16.msra.mxu0 %v106
    %135 = vmatprep.subr.bf16.mxu0 0
    %136 = vmatpush1.bf16.msra.mxu0 %v105
    %137 = vmatprep.subr.bf16.mxu0 0
    %138 = vmatpush2.bf16.msra.mxu0 0
    %139 = vmatprep.subr.bf16.mxu0 0
    %140 = vmatpush2.bf16.msra.mxu0 0
    %141 = vmatprep.subr.bf16.mxu0 0
    %142 = vmatpush2.bf16.msra.mxu0 0
    %143 = vmatprep.subr.bf16.mxu0 0
    %144 = vmatpush2.bf16.msra.mxu0 0
    %145 = vmatprep.subr.bf16.mxu0 0
    %146 = vmatpush2.bf16.msra.mxu0 0
    %147 = vmatprep.subr.bf16.mxu0 0
    %148 = vmatpush2.bf16.msra.mxu0 0
    %149 = vmatprep.subr.bf16.mxu0 0
    %150 = vmatpush2.bf16.msra.mxu0 0
    %151 = vmatprep.subr.bf16.mxu0 0
    %152 = vmatpush2.bf16.msra.mxu0 0
    %153 = vmatprep.mubr.bf16.mxu0 0
    %154 = vmatmul.mubr.bf16.gmra.mxu0 %v71
    %v155 = vpop.f32.mrf.mxu0
    %v156 = vadd.f32 0.0, %v155
    %v157 = vpop.f32.mrf.mxu0
    %v158 = vpop.f32.mrf.mxu0
    %v159 = vadd.f32 0.0, %v158
    %v160 = vpop.f32.mrf.mxu0
    %161 = vdwg.mxu0
    %v162 = vadd.f32 %v47, %v156
    %v163 = vadd.f32 %v48, %v159
    %164 = vst [vmem:[#allocation2] sm:$0xff] %v162
    %165 = vst [vmem:[#allocation2 + $0x8] sm:$0xff] %v163
    // Predicated region
    $region22: #{tpu_custom_call.1} parent=1 // pred_check
      %p166 = pneg %p41
    $region23: #{tpu_custom_call.1} parent=1 // pred_check_branch
      %168 = sbr.rel (%p166) target = $region25
    $region24: #{tpu_custom_call.1} parent=1 // pred_region
      %v169 = vld [vmem:[#allocation2] sm:$0xff]
      %v170 = vld [vmem:[#allocation2 + $0x8] sm:$0xff]
      %171 = vst [vmem:[#allocation8] sm:$0xff] %v169
      %172 = vst [vmem:[#allocation8 + $0x8] sm:$0xff] %v170
    $region25: #{tpu_custom_call.1} parent=1 // pred_fallthru
      _
    // Predicated region
    $region26: #{tpu_custom_call.1} parent=1 // pred_check
      _
    $region27: #{tpu_custom_call.1} parent=1 // pred_check_branch
      %174 = sbr.rel (0) target = $region29
    $region28: #{tpu_custom_call.1} parent=1 // pred_region
      %s176 = ssub.s32 256, 256
      %177 = vsyncadd [#allocation5], %s176
      %s178 = sshll.u32 [#allocation8], 4
      %s179 = int_to_ptr.vmem [resolvable:$true] %s178
      %184 = dma.vmem_to_hbm [thread:$0]  %s179, 256, %s2, [#allocation5], 128, 128, 8
    $region29: #{tpu_custom_call.1} parent=1 // pred_fallthru
      _
    // Predicated region
    $region30: #{tpu_custom_call.1} parent=1 // pred_check
      _
    $region31: #{tpu_custom_call.1} parent=1 // pred_check_branch
      %186 = sbr.rel (0) target = $region33
    $region32: #{tpu_custom_call.1} parent=1 // pred_region
      %187 = dma.done [#allocation5], 256
    $region33: #{tpu_custom_call.1} parent=1 // pred_fallthru
      _
    %188 = vsyncpa [#allocation4], 1
    %189 = vsyncpa [#allocation7], 1
    %190 = vsyncpa [#allocation5], 1

</llo_original>
